<compile_context>
chip_gen: v7x
topology: tpu7x:2x2x1
jax: 0.10.0
libtpu: 0.0.40
codegen_flags: <defaults>
</compile_context>

<pallas_src>
import math

import jax
import jax.numpy as jnp
import numpy as np
from jax.experimental import pallas as pl
from jax.experimental.pallas import tpu as pltpu

DIM_X, NEW_DIM_X = 8, 8
DIM_Y, NEW_DIM_Y = 8, 8
DIM_OTHER, NEW_DIM_OTHER = 64, 48
FINAL_DIM = 32
D_IN = DIM_X * DIM_Y + DIM_OTHER                      # 128
OUT_DIM_PRE = NEW_DIM_X * NEW_DIM_Y + NEW_DIM_OTHER   # 112

# Conservative per-step VMEM budget for the double-buffered in/out blocks.
# Fits the default scoped limits on v5e (16 MiB, raised below), v6e and v7x.
_VMEM_BUDGET = 24 * 1024 * 1024


def concept_encoder_kernel(x_ref, w_ref, b_ref, o_ref):
    # x_ref: (Bt, fold*D_IN)   w_ref: (fold*D_IN, fold*FINAL_DIM)
    # b_ref: (1, fold*FINAL_DIM) f32   o_ref: (Bt, fold*FINAL_DIM)
    # Single lane-dense MXU contraction; accumulate + bias-add in f32.
    acc = jnp.dot(x_ref[...], w_ref[...], preferred_element_type=jnp.float32)
    o_ref[...] = (acc + b_ref[...]).astype(o_ref.dtype)


def init_params(key):
    ks = jax.random.split(key, 6)
    s = 0.05
    return dict(
        wx=jax.random.normal(ks[0], (NEW_DIM_X, DIM_X), jnp.float32) * s,
        wy=jax.random.normal(ks[1], (NEW_DIM_Y, DIM_Y), jnp.float32) * s,
        wo=jax.random.normal(ks[2], (NEW_DIM_OTHER, DIM_OTHER), jnp.float32) * s,
        bo=jax.random.normal(ks[3], (NEW_DIM_OTHER,), jnp.float32) * s,
        wf=jax.random.normal(ks[4], (FINAL_DIM, OUT_DIM_PRE), jnp.float32) * s,
        bf=jax.random.normal(ks[5], (FINAL_DIM,), jnp.float32) * s,
    )


def _fuse_weights(params):
    """Fold linear_X/linear_Y/linear_other/final_enc into one (D_IN, FINAL_DIM)
    weight and a (FINAL_DIM,) bias.  Weight-only algebra, f32."""
    wx, wy = params['wx'], params['wy']
    wo, bo = params['wo'], params['bo']
    wf, bf = params['wf'], params['bf']
    nxy = NEW_DIM_X * NEW_DIM_Y

    # Module: xy_flat[..., i*ndy + j] = sum_{x,y} x[..., y*dx+x] * Wx[i,x] * Wy[j,y]
    # => K[i*ndy+j, y*dx+x] = Wx[i,x] * Wy[j,y]
    k = jnp.einsum('ix,jy->ijyx', wx, wy).reshape(nxy, DIM_Y * DIM_X)
    w_eff_xy = wf[:, :nxy] @ k                      # (FINAL_DIM, dy*dx)
    w_eff_o = wf[:, nxy:] @ wo                      # (FINAL_DIM, dim_other)
    w_eff = jnp.concatenate([w_eff_xy, w_eff_o], axis=1).T   # (D_IN, FINAL_DIM)
    b_eff = bf + wf[:, nxy:] @ bo                   # (FINAL_DIM,)
    return w_eff.astype(jnp.float32), b_eff.astype(jnp.float32)


def concept_encoder_pallas(x, params, block_rows=8192):
    lead = x.shape[:-1]
    assert x.shape[-1] == D_IN
    rows = math.prod(lead) if lead else 1
    out_dtype = x.dtype  # stream activations / output in the model's dtype

    w_eff, b_eff = _fuse_weights(params)

    # Lane-dense output fold: pack `fold` logical rows per kernel row so the
    # output tile is fold*32 wide (128 when fold=4 -> unmasked stores).
    fold = 4 if rows % 4 == 0 else (2 if rows % 2 == 0 else 1)
    d_in, d_out = D_IN * fold, FINAL_DIM * fold
    folded_rows = rows // fold

    # block_diag(W_eff, ..., W_eff): [x0|x1|x2|x3] @ W_blk = [y0|y1|y2|y3].
    w_blk = jnp.kron(jnp.eye(fold, dtype=jnp.float32), w_eff) if fold > 1 else w_eff
    w_blk = w_blk.astype(x.dtype)                               # bf16-native MXU path
    b_blk = jnp.tile(b_eff.reshape(1, FINAL_DIM), (1, fold))    # stays f32

    # Free row-major regroup (no pad, no dtype copy).
    xf = x.reshape(folded_rows, d_in)

    # Row-block sizing: as large as the VMEM budget allows (double-buffered
    # input + output blocks), aligned to the (8,128) rule.
    per_frow = 2 * (d_in * x.dtype.itemsize + d_out * jnp.dtype(out_dtype).itemsize)
    max_frows = max(8, _VMEM_BUDGET // per_frow)
    blk = min(max(1, block_rows // fold), max_frows, folded_rows)
    if blk < folded_rows:
        blk = max(8, (blk // 8) * 8)          # tiled: row block multiple of 8
    elif folded_rows >= 2048:
        # A single giant block would leave one v7x TensorCore idle; split so the
        # "parallel" grid has >= 2 blocks to shard across cores.
        blk = max(8, (pl.cdiv(folded_rows, 2) // 8) * 8)
    grid = (pl.cdiv(folded_rows, blk),)       # partial last block masked by Pallas

    out = pl.pallas_call(
        concept_encoder_kernel,
        out_shape=jax.ShapeDtypeStruct((folded_rows, d_out), out_dtype),
        grid_spec=pltpu.PrefetchScalarGridSpec(
            num_scalar_prefetch=0,
            grid=grid,
            in_specs=[
                pl.BlockSpec((blk, d_in), lambda b: (b, 0)),
                pl.BlockSpec((d_in, d_out), lambda b: (0, 0)),   # resident weight
                pl.BlockSpec((1, d_out), lambda b: (0, 0)),      # resident bias
            ],
            out_specs=pl.BlockSpec((blk, d_out), lambda b: (b, 0)),
        ),
        compiler_params=pltpu.CompilerParams(
            dimension_semantics=("parallel",),
            vmem_limit_bytes=32 * 1024 * 1024,
        ),
    )(xf, w_blk, b_blk)

    return out.reshape(rows, FINAL_DIM).reshape(*lead, FINAL_DIM)


def concept_encoder_ref(x, params):
    # Pure-JAX reference mirroring the PyTorch forward exactly (no fusion).
    xy = x[..., :DIM_X * DIM_Y].reshape(*x.shape[:-1], DIM_Y, DIM_X)
    t1 = xy @ params['wx'].T                        # linear_X (no bias)
    t2 = jnp.swapaxes(t1, -2, -1) @ params['wy'].T  # transpose + linear_Y
    xy_flat = t2.reshape(*x.shape[:-1], -1)
    other = x[..., DIM_X * DIM_Y:] @ params['wo'].T + params['bo']  # linear_other
    res = jnp.concatenate([xy_flat, other], axis=-1)
    return res @ params['wf'].T + params['bf']      # final_enc


if __name__ == "__main__":
    key = jax.random.PRNGKey(0)
    pkey, xkey = jax.random.split(key)
    params = init_params(pkey)
    # (batch=2, seq=8, features=128)
    x32 = jax.random.normal(xkey, (2, 8, D_IN), jnp.float32)

    fwd = jax.jit(concept_encoder_pallas)   # weight fusion traced/compiled once

    # f32 streaming path — tight tolerance vs the unfused reference.
    out32 = jax.block_until_ready(fwd(x32, params))
    ref32 = concept_encoder_ref(x32, params)
    np.testing.assert_allclose(np.asarray(out32), np.asarray(ref32),
                               rtol=1e-3, atol=2e-5)

    # bf16 streaming path (the recommended deployment dtype) — looser tolerance
    # because operands are rounded to bf16 before the fused contraction.
    xbf = x32.astype(jnp.bfloat16)
    outbf = jax.block_until_ready(fwd(xbf, params))
    refbf = concept_encoder_ref(xbf.astype(jnp.float32), params)
    np.testing.assert_allclose(np.asarray(outbf).astype(np.float32),
                               np.asarray(refbf), rtol=5e-2, atol=5e-2)

    print("KERNEL_OK")
</pallas_src>

<mosaic_0001>
module attributes {stable_mosaic.version = 11 : i64} {
  func.func @concept_encoder_kernel(%arg0: i32, %arg1: memref<4x512xf32, #tpu.memory_space<vmem>>, %arg2: memref<512x128xf32, #tpu.memory_space<vmem>>, %arg3: memref<1x128xf32, #tpu.memory_space<vmem>>, %arg4: memref<4x128xf32, #tpu.memory_space<vmem>>) attributes {dimension_semantics = [#tpu.dimension_semantics<parallel>], iteration_bounds = array<i64: 1>, scalar_prefetch = 0 : i64, scratch_operands = 0 : i64, tpu.core_type = #tpu.core_type<tc>, window_params = [{transform_indices = @transform_0, window_bounds = array<i64: 4, 512>}, {pipeline_mode = #tpu.pipeline_mode<synchronous>, transform_indices = @transform_1, window_bounds = array<i64: 512, 128>}, {pipeline_mode = #tpu.pipeline_mode<synchronous>, transform_indices = @transform_2, window_bounds = array<i64: 1, 128>}, {transform_indices = @transform_3, window_bounds = array<i64: 4, 128>}]} {
    %c0 = arith.constant 0 : index
    %c0_0 = arith.constant 0 : index
    %0 = vector.load %arg1[%c0, %c0_0] : memref<4x512xf32, #tpu.memory_space<vmem>>, vector<4x512xf32>
    %c0_1 = arith.constant 0 : index
    %c0_2 = arith.constant 0 : index
    %1 = vector.load %arg2[%c0_1, %c0_2] : memref<512x128xf32, #tpu.memory_space<vmem>>, vector<512x128xf32>
    %cst = arith.constant dense<0.000000e+00> : vector<4x128xf32>
    %2 = tpu.matmul %0, %1, %cst {dimension_numbers = #tpu.dot_dimension_numbers<[1], [0], [0], [1], [0, 0, 1, 1], [], []>} : vector<4x512xf32>, vector<512x128xf32>, vector<4x128xf32> -> vector<4x128xf32>
    %c0_3 = arith.constant 0 : index
    %c0_4 = arith.constant 0 : index
    %3 = vector.load %arg3[%c0_3, %c0_4] : memref<1x128xf32, #tpu.memory_space<vmem>>, vector<1x128xf32>
    %4 = vector.broadcast %3 : vector<1x128xf32> to vector<4x128xf32>
    %5 = arith.addf %2, %4 : vector<4x128xf32>
    %c0_5 = arith.constant 0 : index
    %c0_6 = arith.constant 0 : index
    %6 = vector.load %arg4[%c0_5, %c0_6] : memref<4x128xf32, #tpu.memory_space<vmem>>, vector<4x128xf32>
    tpu.vector_store %arg4[%c0_5, %c0_6], %5 {strides = array<i32>} : memref<4x128xf32, #tpu.memory_space<vmem>>, vector<4x128xf32>,
    return
  }
  func.func @transform_0(%arg0: i32) -> (i32, i32) {
    %c0_i32 = arith.constant 0 : i32
    %c0_i32_0 = arith.constant 0 : i32
    return %arg0, %c0_i32 : i32, i32
  }
  func.func @transform_1(%arg0: i32) -> (i32, i32) {
    %c0_i32 = arith.constant 0 : i32
    %c0_i32_0 = arith.constant 0 : i32
    %c0_i32_1 = arith.constant 0 : i32
    return %c0_i32, %c0_i32_0 : i32, i32
  }
  func.func @transform_2(%arg0: i32) -> (i32, i32) {
    %c0_i32 = arith.constant 0 : i32
    %c0_i32_0 = arith.constant 0 : i32
    %c0_i32_1 = arith.constant 0 : i32
    return %c0_i32, %c0_i32_0 : i32, i32
  }
  func.func @transform_3(%arg0: i32) -> (i32, i32) {
    %c0_i32 = arith.constant 0 : i32
    %c0_i32_0 = arith.constant 0 : i32
    return %arg0, %c0_i32 : i32, i32
  }
}

</mosaic_0001>

<llo_original>
// kernel: concept_encoder_pallas.1
$region0: #{concept_encoder_pallas.1}
  #allocation0 [shape = 'u32[]', space=smem, size = 0x4, offset = 0x4, fixed_abs, tag = 'smem constant byte address 0x4 - core index']
  #allocation1 [shape = 'u32[144,128]{1,0:T(1,128)}', space=vmem, size = 0x12000, scoped, tag = 'internal scratch']
  %s0 = inlined_call_operand.vmem [shape: f32[4,512], index: 0, kind: input, shape index: {}]
  %s1 = inlined_call_operand.vmem [shape: f32[512,128], index: 1, kind: input, shape index: {}]
  %s2 = inlined_call_operand.vmem [shape: f32[1,128], index: 2, kind: input, shape index: {}]
  %s3 = inlined_call_operand.vmem [shape: f32[4,128], index: 3, kind: output, shape index: {}]
  %s4 = sld [smem:[#allocation0]]
  $region22: #{concept_encoder_pallas.1} parent=0
    _
  %s6 = ssub.s32 1, %s4
  %s7 = scalar_select 0, %s6, %s4
  // Predicated region
  $region2: #{concept_encoder_pallas.1} parent=0 // pred_check
    _
  $region3: #{concept_encoder_pallas.1} parent=0 // pred_check_branch
    %9 = sbr.rel (0) target = $region5
  $region4: #{concept_encoder_pallas.1} parent=0 // pred_region
    _
  $region5: #{concept_encoder_pallas.1} parent=0 // pred_fallthru
    _
  // Predicated region
  $region6: #{concept_encoder_pallas.1} parent=0 // pred_check
    _
  $region7: #{concept_encoder_pallas.1} parent=0 // pred_check_branch
    %11 = sbr.rel (0) target = $region9
  $region8: #{concept_encoder_pallas.1} parent=0 // pred_region
    _
  $region9: #{concept_encoder_pallas.1} parent=0 // pred_fallthru
    _
  // Predicated region
  $region10: #{concept_encoder_pallas.1} parent=0 // pred_check
    _
  $region11: #{concept_encoder_pallas.1} parent=0 // pred_check_branch
    %13 = sbr.rel (0) target = $region13
  $region12: #{concept_encoder_pallas.1} parent=0 // pred_region
    _
  $region13: #{concept_encoder_pallas.1} parent=0 // pred_fallthru
    _
  %v14 = vld [vmem:[%s0] sm:$0xff]
  %v15 = vld [vmem:[%s0 + $0x8] sm:$0xff]
  %v16 = vld [vmem:[%s1] sm:$0xff]
  %v17 = vld [vmem:[%s1 + $0x8] sm:$0xff]
  %v18 = vld [vmem:[%s1 + $0x10] sm:$0xff]
  %v19 = vld [vmem:[%s1 + $0x18] sm:$0xff]
  %v20 = vld [vmem:[%s1 + $0x20] sm:$0xff]
  %v21 = vld [vmem:[%s1 + $0x28] sm:$0xff]
  %v22 = vld [vmem:[%s1 + $0x30] sm:$0xff]
  %v23 = vld [vmem:[%s1 + $0x38] sm:$0xff]
  %v24 = vld [vmem:[%s1 + $0x40] sm:$0xff]
  %v25 = vld [vmem:[%s1 + $0x48] sm:$0xff]
  %v26 = vld [vmem:[%s1 + $0x50] sm:$0xff]
  %v27 = vld [vmem:[%s1 + $0x58] sm:$0xff]
  %v28 = vld [vmem:[%s1 + $0x60] sm:$0xff]
  %v29 = vld [vmem:[%s1 + $0x68] sm:$0xff]
  %v30 = vld [vmem:[%s1 + $0x70] sm:$0xff]
  %v31 = vld [vmem:[%s1 + $0x78] sm:$0xff]
  %v32 = vld [vmem:[%s1 + $0x80] sm:$0xff]
  %v33 = vld [vmem:[%s1 + $0x88] sm:$0xff]
  %v34 = vld [vmem:[%s1 + $0x90] sm:$0xff]
  %v35 = vld [vmem:[%s1 + $0x98] sm:$0xff]
  %v36 = vld [vmem:[%s1 + $0xa0] sm:$0xff]
  %v37 = vld [vmem:[%s1 + $0xa8] sm:$0xff]
  %v38 = vld [vmem:[%s1 + $0xb0] sm:$0xff]
  %v39 = vld [vmem:[%s1 + $0xb8] sm:$0xff]
  %v40 = vld [vmem:[%s1 + $0xc0] sm:$0xff]
  %v41 = vld [vmem:[%s1 + $0xc8] sm:$0xff]
  %v42 = vld [vmem:[%s1 + $0xd0] sm:$0xff]
  %v43 = vld [vmem:[%s1 + $0xd8] sm:$0xff]
  %v44 = vld [vmem:[%s1 + $0xe0] sm:$0xff]
  %v45 = vld [vmem:[%s1 + $0xe8] sm:$0xff]
  %v46 = vld [vmem:[%s1 + $0xf0] sm:$0xff]
  %v47 = vld [vmem:[%s1 + $0xf8] sm:$0xff]
  %v48 = vld [vmem:[%s1 + $0x100] sm:$0xff]
  %v49 = vld [vmem:[%s1 + $0x108] sm:$0xff]
  %v50 = vld [vmem:[%s1 + $0x110] sm:$0xff]
  %v51 = vld [vmem:[%s1 + $0x118] sm:$0xff]
  %v52 = vld [vmem:[%s1 + $0x120] sm:$0xff]
  %v53 = vld [vmem:[%s1 + $0x128] sm:$0xff]
  %v54 = vld [vmem:[%s1 + $0x130] sm:$0xff]
  %v55 = vld [vmem:[%s1 + $0x138] sm:$0xff]
  %v56 = vld [vmem:[%s1 + $0x140] sm:$0xff]
  %v57 = vld [vmem:[%s1 + $0x148] sm:$0xff]
  %v58 = vld [vmem:[%s1 + $0x150] sm:$0xff]
  %v59 = vld [vmem:[%s1 + $0x158] sm:$0xff]
  %v60 = vld [vmem:[%s1 + $0x160] sm:$0xff]
  %v61 = vld [vmem:[%s1 + $0x168] sm:$0xff]
  %v62 = vld [vmem:[%s1 + $0x170] sm:$0xff]
  %v63 = vld [vmem:[%s1 + $0x178] sm:$0xff]
  %v64 = vld [vmem:[%s1 + $0x180] sm:$0xff]
  %v65 = vld [vmem:[%s1 + $0x188] sm:$0xff]
  %v66 = vld [vmem:[%s1 + $0x190] sm:$0xff]
  %v67 = vld [vmem:[%s1 + $0x198] sm:$0xff]
  %v68 = vld [vmem:[%s1 + $0x1a0] sm:$0xff]
  %v69 = vld [vmem:[%s1 + $0x1a8] sm:$0xff]
  %v70 = vld [vmem:[%s1 + $0x1b0] sm:$0xff]
  %v71 = vld [vmem:[%s1 + $0x1b8] sm:$0xff]
  %v72 = vld [vmem:[%s1 + $0x1c0] sm:$0xff]
  %v73 = vld [vmem:[%s1 + $0x1c8] sm:$0xff]
  %v74 = vld [vmem:[%s1 + $0x1d0] sm:$0xff]
  %v75 = vld [vmem:[%s1 + $0x1d8] sm:$0xff]
  %v76 = vld [vmem:[%s1 + $0x1e0] sm:$0xff]
  %v77 = vld [vmem:[%s1 + $0x1e8] sm:$0xff]
  %v78 = vld [vmem:[%s1 + $0x1f0] sm:$0xff]
  %v79 = vld [vmem:[%s1 + $0x1f8] sm:$0xff]
  %v80 = vld [vmem:[%s2] sm:$0x1]
  %v82 = vlaneseq
  %v83 = vshrl.u32 %v82, 7
  %v84 = vsub.s32 0, %v83
  %v85 = vrot.slane %v80, %v84
  %v89 = vcombine.high %v14, %v14
  %v90 = vcombine.high %v15, %v15
  %93 = vmatprep.subr.mxu0 0.0
  %94 = vmatpush1.msra.mxu0 %v16
  %95 = vmatprep.subr.mxu0 0.0
  %96 = vmatpush1.msra.mxu0 %v17
  %97 = vmatprep.subr.mxu0 0.0
  %98 = vmatpush1.msra.mxu0 %v18
  %99 = vmatprep.subr.mxu0 0.0
  %100 = vmatpush1.msra.mxu0 %v19
  %101 = vmatprep.subr.mxu0 0.0
  %102 = vmatpush1.msra.mxu0 %v20
  %103 = vmatprep.subr.mxu0 0.0
  %104 = vmatpush1.msra.mxu0 %v21
  %105 = vmatprep.subr.mxu0 0.0
  %106 = vmatpush1.msra.mxu0 %v22
  %107 = vmatprep.subr.mxu0 0.0
  %108 = vmatpush1.msra.mxu0 %v23
  %109 = vmatprep.subr.mxu0 0.0
  %110 = vmatpush1.msra.mxu0 %v24
  %111 = vmatprep.subr.mxu0 0.0
  %112 = vmatpush1.msra.mxu0 %v25
  %113 = vmatprep.subr.mxu0 0.0
  %114 = vmatpush1.msra.mxu0 %v26
  %115 = vmatprep.subr.mxu0 0.0
  %116 = vmatpush1.msra.mxu0 %v27
  %117 = vmatprep.subr.mxu0 0.0
  %118 = vmatpush1.msra.mxu0 %v28
  %119 = vmatprep.subr.mxu0 0.0
  %120 = vmatpush1.msra.mxu0 %v29
  %121 = vmatprep.subr.mxu0 0.0
  %122 = vmatpush1.msra.mxu0 %v30
  %123 = vmatprep.subr.mxu0 0.0
  %124 = vmatpush1.msra.mxu0 %v31
  %125 = vmatprep.subr.mxu0 0.0
  %126 = vmatpush1.msra.mxu0 %v32
  %127 = vmatprep.subr.mxu0 0.0
  %128 = vmatpush1.msra.mxu0 %v33
  %129 = vmatprep.subr.mxu0 0.0
  %130 = vmatpush1.msra.mxu0 %v34
  %131 = vmatprep.subr.mxu0 0.0
  %132 = vmatpush1.msra.mxu0 %v35
  %133 = vmatprep.subr.mxu0 0.0
  %134 = vmatpush1.msra.mxu0 %v36
  %135 = vmatprep.subr.mxu0 0.0
  %136 = vmatpush1.msra.mxu0 %v37
  %137 = vmatprep.subr.mxu0 0.0
  %138 = vmatpush1.msra.mxu0 %v38
  %139 = vmatprep.subr.mxu0 0.0
  %140 = vmatpush1.msra.mxu0 %v39
  %141 = vmatprep.subr.mxu0 0.0
  %142 = vmatpush1.msra.mxu0 %v40
  %143 = vmatprep.subr.mxu0 0.0
  %144 = vmatpush1.msra.mxu0 %v41
  %145 = vmatprep.subr.mxu0 0.0
  %146 = vmatpush1.msra.mxu0 %v42
  %147 = vmatprep.subr.mxu0 0.0
  %148 = vmatpush1.msra.mxu0 %v43
  %149 = vmatprep.subr.mxu0 0.0
  %150 = vmatpush1.msra.mxu0 %v44
  %151 = vmatprep.subr.mxu0 0.0
  %152 = vmatpush1.msra.mxu0 %v45
  %153 = vmatprep.subr.mxu0 0.0
  %154 = vmatpush1.msra.mxu0 %v46
  %155 = vmatprep.subr.mxu0 0.0
  %156 = vmatpush1.msra.mxu0 %v47
  %157 = vmatprep.mubr.f32.mxu0 %v89
  %158 = vmatmul.mubr.f32.gmra.mrb[0].mxu0 %v14
  %v159 = vpop.f32.mrb[0].mxu0
  %v160 = vadd.f32 %v85, %v159
  %v161 = vpop.f32.mrb[0].mxu0
  %162 = vdwg.mxu0
  %163 = vmatprep.subr.mxu0 0.0
  %164 = vmatpush1.msra.mxu0 %v48
  %165 = vmatprep.subr.mxu0 0.0
  %166 = vmatpush1.msra.mxu0 %v49
  %167 = vmatprep.subr.mxu0 0.0
  %168 = vmatpush1.msra.mxu0 %v50
  %169 = vmatprep.subr.mxu0 0.0
  %170 = vmatpush1.msra.mxu0 %v51
  %171 = vmatprep.subr.mxu0 0.0
  %172 = vmatpush1.msra.mxu0 %v52
  %173 = vmatprep.subr.mxu0 0.0
  %174 = vmatpush1.msra.mxu0 %v53
  %175 = vmatprep.subr.mxu0 0.0
  %176 = vmatpush1.msra.mxu0 %v54
  %177 = vmatprep.subr.mxu0 0.0
  %178 = vmatpush1.msra.mxu0 %v55
  %179 = vmatprep.subr.mxu0 0.0
  %180 = vmatpush1.msra.mxu0 %v56
  %181 = vmatprep.subr.mxu0 0.0
  %182 = vmatpush1.msra.mxu0 %v57
  %183 = vmatprep.subr.mxu0 0.0
  %184 = vmatpush1.msra.mxu0 %v58
  %185 = vmatprep.subr.mxu0 0.0
  %186 = vmatpush1.msra.mxu0 %v59
  %187 = vmatprep.subr.mxu0 0.0
  %188 = vmatpush1.msra.mxu0 %v60
  %189 = vmatprep.subr.mxu0 0.0
  %190 = vmatpush1.msra.mxu0 %v61
  %191 = vmatprep.subr.mxu0 0.0
  %192 = vmatpush1.msra.mxu0 %v62
  %193 = vmatprep.subr.mxu0 0.0
  %194 = vmatpush1.msra.mxu0 %v63
  %195 = vmatprep.subr.mxu0 0.0
  %196 = vmatpush1.msra.mxu0 %v64
  %197 = vmatprep.subr.mxu0 0.0
  %198 = vmatpush1.msra.mxu0 %v65
  %199 = vmatprep.subr.mxu0 0.0
  %200 = vmatpush1.msra.mxu0 %v66
  %201 = vmatprep.subr.mxu0 0.0
  %202 = vmatpush1.msra.mxu0 %v67
  %203 = vmatprep.subr.mxu0 0.0
  %204 = vmatpush1.msra.mxu0 %v68
  %205 = vmatprep.subr.mxu0 0.0
  %206 = vmatpush1.msra.mxu0 %v69
  %207 = vmatprep.subr.mxu0 0.0
  %208 = vmatpush1.msra.mxu0 %v70
  %209 = vmatprep.subr.mxu0 0.0
  %210 = vmatpush1.msra.mxu0 %v71
  %211 = vmatprep.subr.mxu0 0.0
  %212 = vmatpush1.msra.mxu0 %v72
  %213 = vmatprep.subr.mxu0 0.0
  %214 = vmatpush1.msra.mxu0 %v73
  %215 = vmatprep.subr.mxu0 0.0
  %216 = vmatpush1.msra.mxu0 %v74
  %217 = vmatprep.subr.mxu0 0.0
  %218 = vmatpush1.msra.mxu0 %v75
  %219 = vmatprep.subr.mxu0 0.0
  %220 = vmatpush1.msra.mxu0 %v76
  %221 = vmatprep.subr.mxu0 0.0
  %222 = vmatpush1.msra.mxu0 %v77
  %223 = vmatprep.subr.mxu0 0.0
  %224 = vmatpush1.msra.mxu0 %v78
  %225 = vmatprep.subr.mxu0 0.0
  %226 = vmatpush1.msra.mxu0 %v79
  %227 = vmatprep.mubr.f32.mxu0 %v90
  %228 = vmatmul.mubr.f32.gmra.mrb[0].mxu0 %v15
  %v229 = vpop.f32.mrb[0].mxu0
  %v230 = vadd.f32 %v160, %v229
  %v231 = vpop.f32.mrb[0].mxu0
  %232 = vdwg.mxu0
  %233 = vst [vmem:[%s3] sm:$0xf] %v230
  // Predicated region
  $region14: #{concept_encoder_pallas.1} parent=0 // pred_check
    _
  $region15: #{concept_encoder_pallas.1} parent=0 // pred_check_branch
    %235 = sbr.rel (0) target = $region17
  $region16: #{concept_encoder_pallas.1} parent=0 // pred_region
    _
  $region17: #{concept_encoder_pallas.1} parent=0 // pred_fallthru
    _
  // Predicated region
  $region18: #{concept_encoder_pallas.1} parent=0 // pred_check
    _
  $region19: #{concept_encoder_pallas.1} parent=0 // pred_check_branch
    %237 = sbr.rel (0) target = $region21
  $region20: #{concept_encoder_pallas.1} parent=0 // pred_region
    _
  $region21: #{concept_encoder_pallas.1} parent=0 // pred_fallthru
    _

</llo_original>
